<compile_context>
chip_gen: v7x
topology: tpu7x:2x2x1
jax: 0.10.0
libtpu: 0.0.40
codegen_flags: <defaults>
</compile_context>

<pallas_src>
import math
import jax
import jax.numpy as jnp
from jax.experimental import pallas as pl
from jax.experimental.pallas import tpu as pltpu


def _round_up(x, m):
    return (x + m - 1) // m * m


# ---------------------------------------------------------------------------
# Kernels
# ---------------------------------------------------------------------------

def _positive_linear_kernel_bias(x_ref, w_ref, b_ref, o_ref, acc_ref):
    """One (tm, tn) output tile, accumulated over the K grid axis (with bias)."""
    k = pl.program_id(2)

    @pl.when(k == 0)
    def _():
        acc_ref[...] = jnp.zeros_like(acc_ref)

    xv = x_ref[...]
    w = w_ref[...].astype(jnp.float32)
    # Square in f32 on the VPU (PyTorch squares the f32 parameter), then feed
    # the MXU in the input dtype -- no f32xf32 MXU decomposition penalty when
    # the input is bf16. Accumulation stays f32.
    w2 = (w * w).astype(xv.dtype)
    acc_ref[...] += jnp.dot(xv, w2, preferred_element_type=jnp.float32)

    @pl.when(k == pl.num_programs(2) - 1)
    def _():
        # Bias added once per output tile, then one lane-dense store.
        o_ref[...] = (acc_ref[...] + b_ref[...]).astype(o_ref.dtype)


def _positive_linear_kernel_nobias(x_ref, w_ref, o_ref, acc_ref):
    """Same as above but without a bias input (no zeros DMA on the no-bias path)."""
    k = pl.program_id(2)

    @pl.when(k == 0)
    def _():
        acc_ref[...] = jnp.zeros_like(acc_ref)

    xv = x_ref[...]
    w = w_ref[...].astype(jnp.float32)
    w2 = (w * w).astype(xv.dtype)
    acc_ref[...] += jnp.dot(xv, w2, preferred_element_type=jnp.float32)

    @pl.when(k == pl.num_programs(2) - 1)
    def _():
        o_ref[...] = acc_ref[...].astype(o_ref.dtype)


# ---------------------------------------------------------------------------
# Tile selection
# ---------------------------------------------------------------------------

def _choose_lane_tile(dim, pref):
    """Pick a 128-multiple tile <= pref minimizing padded size for `dim`.

    Returns (tile, padded_dim). Default prefs are 256-multiples so that on
    v6e/v7x (2x256 MXUs) the common case keeps full MXU columns; the search
    never picks a tile that adds more padding than a smaller one would.
    """
    pref = _round_up(pref, 128)
    dim_p = _round_up(max(dim, 1), 128)
    if dim_p <= pref:
        return dim_p, dim_p
    best_tile, best_pad = None, None
    for tile in range(pref, 127, -128):
        padded = -(-dim_p // tile) * tile
        if best_pad is None or padded < best_pad:
            best_tile, best_pad = tile, padded
    return best_tile, best_pad


def _choose_batch_tile(batch, tm_max):
    """Balanced sublane-aligned M tile (at most one 8-row granule of waste per block)."""
    m_full = _round_up(max(batch, 1), 8)
    if m_full <= tm_max:
        return m_full, m_full
    nb = -(-m_full // tm_max)
    tm = _round_up(-(-m_full // nb), 8)
    return tm, nb * tm


# ---------------------------------------------------------------------------
# Wrappers
# ---------------------------------------------------------------------------

def prepare_positive_linear(log_weight, bias=None, *, tn_pref=512, tk_pref=512):
    """One-time layout prep: transpose to (K, N) and zero-pad to tile multiples.

    Call this at module-init time and reuse the result across forward calls so
    the per-call forward pays no transpose/pad HBM passes.
    """
    out_features, in_features = log_weight.shape
    tn, n_pad = _choose_lane_tile(out_features, tn_pref)
    tk, k_pad = _choose_lane_tile(in_features, tk_pref)

    w_t = jnp.transpose(log_weight)                      # (K, N) contraction-ready
    w_p = jnp.pad(w_t, ((0, k_pad - in_features), (0, n_pad - out_features)))
    if bias is not None:
        b_p = jnp.pad(bias.astype(jnp.float32).reshape(1, -1),
                      ((0, 0), (0, n_pad - out_features)))
    else:
        b_p = None
    return dict(w=w_p, bias=b_p,
                in_features=in_features, out_features=out_features,
                tn=tn, tk=tk, N=n_pad, K=k_pad)


def positive_linear_prepared(x, prep, *, mxu_dtype=None,
                             vmem_tile_budget_bytes=40 * 1024 * 1024,
                             weight_buffers=2):
    """Forward pass using a prepared (transposed + padded) weight.

    x:   (..., in_features)
    prep: result of prepare_positive_linear
    mxu_dtype: optional dtype (e.g. jnp.bfloat16) for the MXU operands; None
               keeps the input dtype (bit-closer to the PyTorch f32 reference).
    """
    in_features = prep['in_features']
    out_features = prep['out_features']
    assert x.shape[-1] == in_features
    orig_lead = x.shape[:-1]
    x2 = x.reshape(-1, in_features)
    batch = x2.shape[0]
    out_dtype = x.dtype

    tn, tk, n_pad, k_pad = prep['tn'], prep['tk'], prep['N'], prep['K']
    w_p, b_p = prep['w'], prep['bias']

    x_calc_dtype = jnp.dtype(mxu_dtype) if mxu_dtype is not None else jnp.dtype(x.dtype)
    x_isz = x_calc_dtype.itemsize
    w_isz = jnp.dtype(w_p.dtype).itemsize
    o_isz = jnp.dtype(out_dtype).itemsize

    # tm: as big as the VMEM tile budget allows (ideally the whole batch, so the
    # weight streams from HBM exactly once). Budget accounts for double-buffered
    # x / w / out tiles plus the f32 accumulator; 40 MiB keeps us well inside
    # v7x's 64 MiB VMEM (and trivially inside v5e/v6e's 128 MiB).
    denom = 2 * tk * x_isz + 2 * tn * o_isz + 4 * tn
    avail = max(vmem_tile_budget_bytes - 2 * tk * tn * w_isz, 8 * denom)
    tm_max = max(8, (avail // denom) // 8 * 8)
    tm_max = min(tm_max, 4096)
    tm, m_pad = _choose_batch_tile(batch, tm_max)

    # v7x megacore: guarantee >= 2 blocks along a "parallel" axis when possible
    # so both TensorCores get work (no-op cost on single-TC v5e/v6e only when
    # it doesn't add padding).
    if m_pad // tm == 1 and n_pad // tn == 1:
        if n_pad >= 256 and n_pad % 256 == 0:
            tn = n_pad // 2
        elif m_pad >= 16 and m_pad % 16 == 0:
            tm = m_pad // 2

    grid = (m_pad // tm, n_pad // tn, k_pad // tk)
    gm, gn, _ = grid

    x_p = jnp.pad(x2, ((0, m_pad - batch), (0, k_pad - in_features)))
    if mxu_dtype is not None:
        x_p = x_p.astype(mxu_dtype)

    # Weight BlockSpec; deepen buffering only if profiling shows exposed DMA.
    if weight_buffers != 2:
        w_spec = pl.BlockSpec((tk, tn), lambda i, j, k: (k, j),
                              pipeline_mode=pl.Buffered(weight_buffers))
    else:
        w_spec = pl.BlockSpec((tk, tn), lambda i, j, k: (k, j))

    in_specs = [pl.BlockSpec((tm, tk), lambda i, j, k: (i, k)), w_spec]
    args = [x_p, w_p]
    if b_p is not None:
        in_specs.append(pl.BlockSpec((1, tn), lambda i, j, k: (0, j)))
        args.append(b_p)
        kernel = _positive_linear_kernel_bias
    else:
        kernel = _positive_linear_kernel_nobias

    cost = pl.CostEstimate(
        flops=2 * m_pad * n_pad * k_pad + gm * k_pad * n_pad,   # matmul + per-M-block square
        transcendentals=0,
        bytes_accessed=(gn * m_pad * k_pad * x_isz            # x streamed once per N block
                        + gm * k_pad * n_pad * w_isz          # weight streamed once per M block
                        + m_pad * n_pad * o_isz
                        + (n_pad * 4 if b_p is not None else 0)),
    )

    out = pl.pallas_call(
        kernel,
        out_shape=jax.ShapeDtypeStruct((m_pad, n_pad), out_dtype),
        grid_spec=pltpu.PrefetchScalarGridSpec(
            num_scalar_prefetch=0,
            grid=grid,
            in_specs=in_specs,
            out_specs=pl.BlockSpec((tm, tn), lambda i, j, k: (i, j)),
            scratch_shapes=[pltpu.VMEM((tm, tn), jnp.float32)],
        ),
        compiler_params=pltpu.CompilerParams(
            dimension_semantics=("parallel", "parallel", "arbitrary"),
            vmem_limit_bytes=48 * 1024 * 1024,   # v7x-safe (64 MiB/TC); fine on v5e/v6e
        ),
        cost_estimate=cost,
    )(*args)

    y = out[:batch, :out_features]
    return y.reshape(*orig_lead, out_features)


def positive_linear(x, log_weight, bias=None, *, mxu_dtype=None):
    """Convenience wrapper (prepares weight per call).

    For production use, call prepare_positive_linear once and reuse it with
    positive_linear_prepared to avoid the per-call transpose/pad HBM passes.
    """
    prep = prepare_positive_linear(log_weight, bias)
    return positive_linear_prepared(x, prep, mxu_dtype=mxu_dtype)


# ---------------------------------------------------------------------------
# Init mimicking the PyTorch module's reset_parameters()
# ---------------------------------------------------------------------------

def init_positive_linear_params(key, in_features, out_features, bias=False,
                                dtype=jnp.float32):
    k_w, k_b = jax.random.split(key)
    # xavier_uniform_: U(-a, a), a = sqrt(6 / (fan_in + fan_out)), gain=1
    a = math.sqrt(6.0 / (in_features + out_features))
    w = jax.random.uniform(k_w, (out_features, in_features), dtype,
                           minval=-a, maxval=a)
    log_weight = jnp.sqrt(jnp.abs(w))          # .abs_().sqrt_()
    if bias:
        bound = math.sqrt(1.0 / math.sqrt(in_features))
        b = jax.random.uniform(k_b, (out_features,), dtype,
                               minval=-bound, maxval=bound)
    else:
        b = None
    return log_weight, b


if __name__ == "__main__":
    key = jax.random.PRNGKey(0)
    k_x, k_p1, k_p2 = jax.random.split(key, 3)

    batch, in_features, out_features = 8, 32, 16
    x = jax.random.normal(k_x, (batch, in_features), jnp.float32)

    # --- bias=False path (module default), f32-parity MXU dtype -------------
    lw, _ = init_positive_linear_params(k_p1, in_features, out_features,
                                        bias=False)
    prep = prepare_positive_linear(lw, None)
    y = positive_linear_prepared(x, prep)
    y = jax.block_until_ready(y)
    y_ref = x @ (lw ** 2).T
    assert y.shape == (batch, out_features)
    assert jnp.allclose(y, y_ref, atol=1e-5, rtol=1e-5)

    # --- bias=True path ------------------------------------------------------
    lw_b, b = init_positive_linear_params(k_p2, in_features, out_features,
                                          bias=True)
    prep_b = prepare_positive_linear(lw_b, b)
    yb = positive_linear_prepared(x, prep_b)
    yb = jax.block_until_ready(yb)
    yb_ref = x @ (lw_b ** 2).T + b[None, :]
    assert yb.shape == (batch, out_features)
    assert jnp.allclose(yb, yb_ref, atol=1e-5, rtol=1e-5)

    # --- fast bf16-MXU path (operand rounding only; f32 accumulation) -------
    y_fast = positive_linear_prepared(x, prep_b, mxu_dtype=jnp.bfloat16)
    y_fast = jax.block_until_ready(y_fast)
    assert jnp.allclose(y_fast, yb_ref, atol=5e-2, rtol=5e-2)

    print("KERNEL_OK")
</pallas_src>

<mosaic_0001>
module attributes {stable_mosaic.version = 11 : i64} {
  func.func @_positive_linear_kernel_nobias(%arg0: i32, %arg1: i32, %arg2: i32, %arg3: memref<8x128xf32, #tpu.memory_space<vmem>>, %arg4: memref<128x128xf32, #tpu.memory_space<vmem>>, %arg5: memref<8x128xf32, #tpu.memory_space<vmem>>, %arg6: memref<8x128xf32, #tpu.memory_space<vmem>>) attributes {dimension_semantics = [#tpu.dimension_semantics<parallel>, #tpu.dimension_semantics<parallel>, #tpu.dimension_semantics<arbitrary>], iteration_bounds = array<i64: 1, 1, 1>, scalar_prefetch = 0 : i64, scratch_operands = 1 : i64, tpu.core_type = #tpu.core_type<tc>, window_params = [{transform_indices = @transform_0, window_bounds = array<i64: 8, 128>}, {transform_indices = @transform_1, window_bounds = array<i64: 128, 128>}, {transform_indices = @transform_2, window_bounds = array<i64: 8, 128>}]} {
    %c0_i32 = arith.constant 0 : i32
    %0 = arith.cmpi eq, %arg2, %c0_i32 : i32
    %1 = arith.extui %0 : i1 to i32
    %c0_i32_0 = arith.constant 0 : i32
    %2 = arith.cmpi ne, %1, %c0_i32_0 : i32
    scf.if %2 {
      %cst_10 = arith.constant 0.000000e+00 : f32
      %13 = vector.broadcast %cst_10 : f32 to vector<8x128xf32>
      %c0_11 = arith.constant 0 : index
      %c0_12 = arith.constant 0 : index
      %14 = vector.load %arg6[%c0_11, %c0_12] : memref<8x128xf32, #tpu.memory_space<vmem>>, vector<8x128xf32>
      tpu.vector_store %arg6[%c0_11, %c0_12], %13 {strides = array<i32>} : memref<8x128xf32, #tpu.memory_space<vmem>>, vector<8x128xf32>,
    } else {
    }
    %c0 = arith.constant 0 : index
    %c0_1 = arith.constant 0 : index
    %3 = vector.load %arg3[%c0, %c0_1] : memref<8x128xf32, #tpu.memory_space<vmem>>, vector<8x128xf32>
    %c0_2 = arith.constant 0 : index
    %c0_3 = arith.constant 0 : index
    %4 = vector.load %arg4[%c0_2, %c0_3] : memref<128x128xf32, #tpu.memory_space<vmem>>, vector<128x128xf32>
    %5 = arith.mulf %4, %4 : vector<128x128xf32>
    %c0_4 = arith.constant 0 : index
    %c0_5 = arith.constant 0 : index
    %6 = vector.load %arg6[%c0_4, %c0_5] : memref<8x128xf32, #tpu.memory_space<vmem>>, vector<8x128xf32>
    %cst = arith.constant dense<0.000000e+00> : vector<8x128xf32>
    %7 = tpu.matmul %3, %5, %cst {dimension_numbers = #tpu.dot_dimension_numbers<[1], [0], [0], [1], [0, 0, 1, 1], [], []>} : vector<8x128xf32>, vector<128x128xf32>, vector<8x128xf32> -> vector<8x128xf32>
    %8 = arith.addf %6, %7 : vector<8x128xf32>
    %c0_6 = arith.constant 0 : index
    %c0_7 = arith.constant 0 : index
    %9 = vector.load %arg6[%c0_6, %c0_7] : memref<8x128xf32, #tpu.memory_space<vmem>>, vector<8x128xf32>
    tpu.vector_store %arg6[%c0_6, %c0_7], %8 {strides = array<i32>} : memref<8x128xf32, #tpu.memory_space<vmem>>, vector<8x128xf32>,
    %c0_i32_8 = arith.constant 0 : i32
    %10 = arith.cmpi eq, %arg2, %c0_i32_8 : i32
    %11 = arith.extui %10 : i1 to i32
    %c0_i32_9 = arith.constant 0 : i32
    %12 = arith.cmpi ne, %11, %c0_i32_9 : i32
    scf.if %12 {
      %c0_10 = arith.constant 0 : index
      %c0_11 = arith.constant 0 : index
      %13 = vector.load %arg6[%c0_10, %c0_11] : memref<8x128xf32, #tpu.memory_space<vmem>>, vector<8x128xf32>
      %c0_12 = arith.constant 0 : index
      %c0_13 = arith.constant 0 : index
      %14 = vector.load %arg5[%c0_12, %c0_13] : memref<8x128xf32, #tpu.memory_space<vmem>>, vector<8x128xf32>
      tpu.vector_store %arg5[%c0_12, %c0_13], %13 {strides = array<i32>} : memref<8x128xf32, #tpu.memory_space<vmem>>, vector<8x128xf32>,
    } else {
    }
    return
  }
  func.func @transform_0(%arg0: i32, %arg1: i32, %arg2: i32) -> (i32, i32) {
    %c0_i32 = arith.constant 0 : i32
    return %arg0, %arg2 : i32, i32
  }
  func.func @transform_1(%arg0: i32, %arg1: i32, %arg2: i32) -> (i32, i32) {
    %c0_i32 = arith.constant 0 : i32
    return %arg2, %arg1 : i32, i32
  }
  func.func @transform_2(%arg0: i32, %arg1: i32, %arg2: i32) -> (i32, i32) {
    %c0_i32 = arith.constant 0 : i32
    return %arg0, %arg1 : i32, i32
  }
}

</mosaic_0001>

<llo_original>
// kernel: tpu_custom_call.1
$region0: #{tpu_custom_call.1}
  #allocation0 [shape = 'u32[]', space=smem, size = 0x4, offset = 0x4, fixed_abs, tag = 'smem constant byte address 0x4 - core index']
  #allocation1 [shape = 'u32[144,128]{1,0:T(1,128)}', space=vmem, size = 0x12000, scoped, tag = 'internal scratch']
  #allocation2 [shape = 'f32[8,128]{1,0:T(8,128)}', space=vmem, size = 0x1000, scoped, tag = 'scratch operand']
  %s0 = inlined_call_operand.hbm [shape: f32[8,128], index: 0, kind: input, shape index: {}]
  %s1 = inlined_call_operand.hbm [shape: f32[128,128], index: 1, kind: input, shape index: {}]
  %s2 = inlined_call_operand.hbm [shape: f32[8,128], index: 2, kind: output, shape index: {}]
  %s3 = sld [smem:[#allocation0]]
  $region34: #{tpu_custom_call.1} parent=0
    _
  %s5 = ssub.s32 1, %s3
  %s6 = scalar_select 0, %s5, %s3
  $region1: #{tpu_custom_call.1} parent=0
    #allocation3 [shape = 'u8[4096]{0}', space=vmem, size = 0x1000, scoped, tag = 'input window, operand 0, single buffered']
    #allocation4 [shape = 's32[1]{0}', space=sflag, size = 0x4, scoped, tag = 'scoped memory for tpu_custom_call.1']
    #allocation5 [shape = 's32[1]{0}', space=sflag, size = 0x4, scoped, tag = 'scoped memory for tpu_custom_call.1']
    #allocation6 [shape = 'u8[65536]{0}', space=vmem, size = 0x10000, scoped, tag = 'input window, operand 1, single buffered']
    #allocation7 [shape = 's32[1]{0}', space=sflag, size = 0x4, scoped, tag = 'scoped memory for tpu_custom_call.1']
    #allocation8 [shape = 'u8[4096]{0}', space=vmem, size = 0x1000, scoped, tag = 'output window, operand 0, single buffered']
    %7 = vsyncpa [#allocation4], 0
    %8 = vsyncpa [#allocation7], 0
    %9 = vsyncpa [#allocation5], 0
    // Predicated region
    $region2: #{tpu_custom_call.1} parent=1 // pred_check
      _
    $region3: #{tpu_custom_call.1} parent=1 // pred_check_branch
      %11 = sbr.rel (0) target = $region5
    $region4: #{tpu_custom_call.1} parent=1 // pred_region
      %s13 = ssub.s32 128, 128
      %14 = vsyncadd [#allocation4], %s13
      %s16 = sshll.u32 [#allocation3], 4
      %s17 = int_to_ptr.vmem [resolvable:$true] %s16
      %19 = dma.hbm_to_vmem [thread:$0]  %s0, 128, %s17, [#allocation4]
    $region5: #{tpu_custom_call.1} parent=1 // pred_fallthru
      _
    // Predicated region
    $region6: #{tpu_custom_call.1} parent=1 // pred_check
      _
    $region7: #{tpu_custom_call.1} parent=1 // pred_check_branch
      %21 = sbr.rel (0) target = $region9
    $region8: #{tpu_custom_call.1} parent=1 // pred_region
      %s23 = ssub.s32 2048, 2048
      %24 = vsyncadd [#allocation7], %s23
      %s25 = sshll.u32 [#allocation6], 4
      %s26 = int_to_ptr.vmem [resolvable:$true] %s25
      %31 = dma.hbm_to_vmem [thread:$0]  %s1, 2048, %s26, [#allocation7], 128, 128, 8
    $region9: #{tpu_custom_call.1} parent=1 // pred_fallthru
      _
    // Predicated region
    $region10: #{tpu_custom_call.1} parent=1 // pred_check
      _
    $region11: #{tpu_custom_call.1} parent=1 // pred_check_branch
      %33 = sbr.rel (0) target = $region13
    $region12: #{tpu_custom_call.1} parent=1 // pred_region
      %34 = dma.done [#allocation4], 128
    $region13: #{tpu_custom_call.1} parent=1 // pred_fallthru
      _
    // Predicated region
    $region14: #{tpu_custom_call.1} parent=1 // pred_check
      _
    $region15: #{tpu_custom_call.1} parent=1 // pred_check_branch
      %36 = sbr.rel (0) target = $region17
    $region16: #{tpu_custom_call.1} parent=1 // pred_region
      %37 = dma.done [#allocation7], 2048
    $region17: #{tpu_custom_call.1} parent=1 // pred_fallthru
      _
    %p38 = scmp.eq.s32.totalorder 0, 0
    // Predicated region
    $region18: #{tpu_custom_call.1} parent=1 // pred_check
      %p39 = pneg %p38
    $region19: #{tpu_custom_call.1} parent=1 // pred_check_branch
      %41 = sbr.rel (%p39) target = $region21
    $region20: #{tpu_custom_call.1} parent=1 // pred_region
      %42 = vst [vmem:[#allocation2] sm:$0xff] 0.0
    $region21: #{tpu_custom_call.1} parent=1 // pred_fallthru
      _
    %v43 = vld [vmem:[#allocation3] sm:$0xff]
    %v44 = vld [vmem:[#allocation6] sm:$0xff]
    %v45 = vld [vmem:[#allocation6 + $0x8] sm:$0xff]
    %v46 = vld [vmem:[#allocation6 + $0x10] sm:$0xff]
    %v47 = vld [vmem:[#allocation6 + $0x18] sm:$0xff]
    %v48 = vld [vmem:[#allocation6 + $0x20] sm:$0xff]
    %v49 = vld [vmem:[#allocation6 + $0x28] sm:$0xff]
    %v50 = vld [vmem:[#allocation6 + $0x30] sm:$0xff]
    %v51 = vld [vmem:[#allocation6 + $0x38] sm:$0xff]
    %v52 = vld [vmem:[#allocation6 + $0x40] sm:$0xff]
    %v53 = vld [vmem:[#allocation6 + $0x48] sm:$0xff]
    %v54 = vld [vmem:[#allocation6 + $0x50] sm:$0xff]
    %v55 = vld [vmem:[#allocation6 + $0x58] sm:$0xff]
    %v56 = vld [vmem:[#allocation6 + $0x60] sm:$0xff]
    %v57 = vld [vmem:[#allocation6 + $0x68] sm:$0xff]
    %v58 = vld [vmem:[#allocation6 + $0x70] sm:$0xff]
    %v59 = vld [vmem:[#allocation6 + $0x78] sm:$0xff]
    %v60 = vmul.f32 %v44, %v44
    %v61 = vmul.f32 %v45, %v45
    %v62 = vmul.f32 %v46, %v46
    %v63 = vmul.f32 %v47, %v47
    %v64 = vmul.f32 %v48, %v48
    %v65 = vmul.f32 %v49, %v49
    %v66 = vmul.f32 %v50, %v50
    %v67 = vmul.f32 %v51, %v51
    %v68 = vmul.f32 %v52, %v52
    %v69 = vmul.f32 %v53, %v53
    %v70 = vmul.f32 %v54, %v54
    %v71 = vmul.f32 %v55, %v55
    %v72 = vmul.f32 %v56, %v56
    %v73 = vmul.f32 %v57, %v57
    %v74 = vmul.f32 %v58, %v58
    %v75 = vmul.f32 %v59, %v59
    %v76 = vld [vmem:[#allocation2] sm:$0xff]
    %77 = vmatprep.subr.mxu0 0.0
    %78 = vmatpush1.msra.mxu0 %v60
    %79 = vmatprep.subr.mxu0 0.0
    %80 = vmatpush1.msra.mxu0 %v61
    %81 = vmatprep.subr.mxu0 0.0
    %82 = vmatpush1.msra.mxu0 %v62
    %83 = vmatprep.subr.mxu0 0.0
    %84 = vmatpush1.msra.mxu0 %v63
    %85 = vmatprep.subr.mxu0 0.0
    %86 = vmatpush1.msra.mxu0 %v64
    %87 = vmatprep.subr.mxu0 0.0
    %88 = vmatpush1.msra.mxu0 %v65
    %89 = vmatprep.subr.mxu0 0.0
    %90 = vmatpush1.msra.mxu0 %v66
    %91 = vmatprep.subr.mxu0 0.0
    %92 = vmatpush1.msra.mxu0 %v67
    %93 = vmatprep.subr.mxu0 0.0
    %94 = vmatpush1.msra.mxu0 %v68
    %95 = vmatprep.subr.mxu0 0.0
    %96 = vmatpush1.msra.mxu0 %v69
    %97 = vmatprep.subr.mxu0 0.0
    %98 = vmatpush1.msra.mxu0 %v70
    %99 = vmatprep.subr.mxu0 0.0
    %100 = vmatpush1.msra.mxu0 %v71
    %101 = vmatprep.subr.mxu0 0.0
    %102 = vmatpush1.msra.mxu0 %v72
    %103 = vmatprep.subr.mxu0 0.0
    %104 = vmatpush1.msra.mxu0 %v73
    %105 = vmatprep.subr.mxu0 0.0
    %106 = vmatpush1.msra.mxu0 %v74
    %107 = vmatprep.subr.mxu0 0.0
    %108 = vmatpush1.msra.mxu0 %v75
    %109 = vmatprep.subr.mxu0 0.0
    %110 = vmatpush1.msra.mxu0 0.0
    %111 = vmatprep.subr.mxu0 0.0
    %112 = vmatpush1.msra.mxu0 0.0
    %113 = vmatprep.subr.mxu0 0.0
    %114 = vmatpush1.msra.mxu0 0.0
    %115 = vmatprep.subr.mxu0 0.0
    %116 = vmatpush1.msra.mxu0 0.0
    %117 = vmatprep.subr.mxu0 0.0
    %118 = vmatpush1.msra.mxu0 0.0
    %119 = vmatprep.subr.mxu0 0.0
    %120 = vmatpush1.msra.mxu0 0.0
    %121 = vmatprep.subr.mxu0 0.0
    %122 = vmatpush1.msra.mxu0 0.0
    %123 = vmatprep.subr.mxu0 0.0
    %124 = vmatpush1.msra.mxu0 0.0
    %125 = vmatprep.subr.mxu0 0.0
    %126 = vmatpush1.msra.mxu0 0.0
    %127 = vmatprep.subr.mxu0 0.0
    %128 = vmatpush1.msra.mxu0 0.0
    %129 = vmatprep.subr.mxu0 0.0
    %130 = vmatpush1.msra.mxu0 0.0
    %131 = vmatprep.subr.mxu0 0.0
    %132 = vmatpush1.msra.mxu0 0.0
    %133 = vmatprep.subr.mxu0 0.0
    %134 = vmatpush1.msra.mxu0 0.0
    %135 = vmatprep.subr.mxu0 0.0
    %136 = vmatpush1.msra.mxu0 0.0
    %137 = vmatprep.subr.mxu0 0.0
    %138 = vmatpush1.msra.mxu0 0.0
    %139 = vmatprep.subr.mxu0 0.0
    %140 = vmatpush1.msra.mxu0 0.0
    %141 = vmatprep.mubr.f32.mxu0 0.0
    %142 = vmatmul.mubr.f32.gmra.mrb[0].mxu0 %v43
    %v143 = vpop.f32.mrb[0].mxu0
    %v144 = vadd.f32 0.0, %v143
    %v145 = vpop.f32.mrb[0].mxu0
    %146 = vdwg.mxu0
    %v147 = vadd.f32 %v76, %v144
    %148 = vst [vmem:[#allocation2] sm:$0xff] %v147
    // Predicated region
    $region22: #{tpu_custom_call.1} parent=1 // pred_check
      %p149 = pneg %p38
    $region23: #{tpu_custom_call.1} parent=1 // pred_check_branch
      %151 = sbr.rel (%p149) target = $region25
    $region24: #{tpu_custom_call.1} parent=1 // pred_region
      %v152 = vld [vmem:[#allocation2] sm:$0xff]
      %153 = vst [vmem:[#allocation8] sm:$0xff] %v152
    $region25: #{tpu_custom_call.1} parent=1 // pred_fallthru
      _
    // Predicated region
    $region26: #{tpu_custom_call.1} parent=1 // pred_check
      _
    $region27: #{tpu_custom_call.1} parent=1 // pred_check_branch
      %155 = sbr.rel (0) target = $region29
    $region28: #{tpu_custom_call.1} parent=1 // pred_region
      %s157 = ssub.s32 128, 128
      %158 = vsyncadd [#allocation5], %s157
      %s160 = sshll.u32 [#allocation8], 4
      %s161 = int_to_ptr.vmem [resolvable:$true] %s160
      %163 = dma.vmem_to_hbm [thread:$0]  %s161, 128, %s2, [#allocation5]
    $region29: #{tpu_custom_call.1} parent=1 // pred_fallthru
      _
    // Predicated region
    $region30: #{tpu_custom_call.1} parent=1 // pred_check
      _
    $region31: #{tpu_custom_call.1} parent=1 // pred_check_branch
      %165 = sbr.rel (0) target = $region33
    $region32: #{tpu_custom_call.1} parent=1 // pred_region
      %166 = dma.done [#allocation5], 128
    $region33: #{tpu_custom_call.1} parent=1 // pred_fallthru
      _
    %167 = vsyncpa [#allocation4], 1
    %168 = vsyncpa [#allocation7], 1
    %169 = vsyncpa [#allocation5], 1

</llo_original>
